<compile_context>
chip_gen: v6e
topology: v6e:2x2x1
jax: 0.10.0
libtpu: 0.0.40
codegen_flags: <defaults>
</compile_context>

<pallas_src>
import jax
import jax.numpy as jnp
from jax.experimental import pallas as pl
from jax.experimental.pallas import tpu as pltpu


def _round_up(x, m):
    return ((x + m - 1) // m) * m


def se_kernel(x_ref, w1t_ref, w2t_ref, o_ref):
    # x_ref: (tm, C) tile of rows; w1t_ref: (C, Cr_pad); w2t_ref: (Cr_pad, C)
    # AdaptiveAvgPool1d(channel) with input length == channel is the identity
    # (each output bin averages exactly one element).
    y = x_ref[...].astype(jnp.float32)

    # fc: Linear(C -> C//r, no bias) -> ReLU -> Linear(C//r -> C, no bias) -> Sigmoid.
    # Hidden dim is zero-padded to 128 lanes in the wrapper (numerically identical).
    h = jnp.dot(y, w1t_ref[...], preferred_element_type=jnp.float32)
    h = jnp.maximum(h, 0.0)
    s = jnp.dot(h, w2t_ref[...], preferred_element_type=jnp.float32)
    s = jax.nn.sigmoid(s)

    # x * y.expand_as(x)
    o_ref[...] = (y * s).astype(o_ref.dtype)


def se_layer(x, w1, w2, *, tm=1024):
    """x: (B, R, C); w1: (C//r, C); w2: (C, C//r)   (PyTorch Linear weight layout)."""
    B, R, C = x.shape
    Cr = w1.shape[0]
    M = B * R

    # ---- row-tile selection --------------------------------------------------
    # Large tiles keep this HBM-bound kernel near the bandwidth roofline; keep at
    # least 2 grid steps when there is enough work so v7x's two TensorCores both
    # get a share of the "parallel" axis.
    tm = _round_up(max(tm, 8), 8)
    tm_eff = min(tm, _round_up(M, 8))
    if tm_eff > 512 and pl.cdiv(M, tm_eff) < 2:
        tm_eff = _round_up(pl.cdiv(M, 2), 8)
    grid_m = pl.cdiv(M, tm_eff)          # tail block (if any) is masked by Pallas

    # ---- weights: transpose + zero-pad hidden dim to a full 128-lane vreg -----
    Cr_pad = max(128, _round_up(Cr, 128))
    w1t = jnp.zeros((C, Cr_pad), jnp.float32).at[:, :Cr].set(
        jnp.transpose(w1).astype(jnp.float32))            # (C, Cr_pad)
    w2t = jnp.zeros((Cr_pad, C), jnp.float32).at[:Cr, :].set(
        jnp.transpose(w2).astype(jnp.float32))            # (Cr_pad, C)

    xf = x.reshape(M, C)

    # ---- explicit scoped-VMEM budget ------------------------------------------
    itemsize = jnp.dtype(x.dtype).itemsize
    vmem_bytes = (4 * tm_eff * C * itemsize        # x in + out, double-buffered
                  + 4 * C * Cr_pad * 4             # both weights, double-buffered
                  + (8 << 20))                     # headroom for intermediates/scratch
    vmem_limit = int(min(max(vmem_bytes, 32 << 20), 64 << 20))

    cost = pl.CostEstimate(
        flops=4 * M * C * Cr_pad + 2 * M * C,
        transcendentals=M * C,                     # sigmoid
        bytes_accessed=2 * M * C * itemsize + 2 * C * Cr_pad * 4,
    )

    out = pl.pallas_call(
        se_kernel,
        out_shape=jax.ShapeDtypeStruct((M, C), x.dtype),
        grid_spec=pltpu.PrefetchScalarGridSpec(
            num_scalar_prefetch=0,
            grid=(grid_m,),
            in_specs=[
                pl.BlockSpec((tm_eff, C), lambda i: (i, 0)),     # rows of x, tiled
                pl.BlockSpec((C, Cr_pad), lambda i: (0, 0)),     # W1^T (padded), resident
                pl.BlockSpec((Cr_pad, C), lambda i: (0, 0)),     # W2^T (padded), resident
            ],
            out_specs=pl.BlockSpec((tm_eff, C), lambda i: (i, 0)),
        ),
        compiler_params=pltpu.CompilerParams(
            dimension_semantics=("parallel",),
            vmem_limit_bytes=vmem_limit,
        ),
        cost_estimate=cost,
    )(xf, w1t, w2t)
    return out.reshape(B, R, C)


def se_layer_reference(x, w1, w2):
    # Pure-JAX reference mirroring the PyTorch forward (pool is identity here).
    y = x.astype(jnp.float32)
    h = jnp.maximum(jnp.einsum("brc,hc->brh", y, w1.astype(jnp.float32)), 0.0)
    s = jax.nn.sigmoid(jnp.einsum("brh,ch->brc", h, w2.astype(jnp.float32)))
    return (y * s).astype(x.dtype)


if __name__ == "__main__":
    channel = 128
    reduction = 16

    key = jax.random.PRNGKey(0)
    kx, k1, k2, kx2 = jax.random.split(key, 4)

    # Deterministic synthetic weights (PyTorch Linear layout: (out_features, in_features)).
    w1 = jax.random.normal(k1, (channel // reduction, channel), dtype=jnp.float32) * 0.05
    w2 = jax.random.normal(k2, (channel, channel // reduction), dtype=jnp.float32) * 0.05

    # Case 1: small, tile-aligned row count.
    B, R = 2, 8                      # x: (B, R, channel); forward requires last dim == channel
    x = jax.random.normal(kx, (B, R, channel), dtype=jnp.float32)
    out = jax.block_until_ready(se_layer(x, w1, w2))
    ref = se_layer_reference(x, w1, w2)
    assert out.shape == x.shape
    assert jnp.allclose(out, ref, atol=1e-5, rtol=1e-5), "mismatch vs reference (aligned)"

    # Case 2: ragged row count (exercises the cdiv grid + masked tail block).
    B2, R2 = 2, 13                   # M = 26, not a multiple of 8
    x2 = jax.random.normal(kx2, (B2, R2, channel), dtype=jnp.float32)
    out2 = jax.block_until_ready(se_layer(x2, w1, w2))
    ref2 = se_layer_reference(x2, w1, w2)
    assert out2.shape == x2.shape
    assert jnp.allclose(out2, ref2, atol=1e-5, rtol=1e-5), "mismatch vs reference (ragged)"

    print("KERNEL_OK")
</pallas_src>

<mosaic_0001>
module attributes {stable_mosaic.version = 11 : i64} {
  func.func @se_kernel(%arg0: i32, %arg1: memref<16x128xf32, #tpu.memory_space<vmem>>, %arg2: memref<128x128xf32, #tpu.memory_space<vmem>>, %arg3: memref<128x128xf32, #tpu.memory_space<vmem>>, %arg4: memref<16x128xf32, #tpu.memory_space<vmem>>) attributes {dimension_semantics = [#tpu.dimension_semantics<parallel>], iteration_bounds = array<i64: 1>, scalar_prefetch = 0 : i64, scratch_operands = 0 : i64, tpu.core_type = #tpu.core_type<tc>, window_params = [{transform_indices = @transform_0, window_bounds = array<i64: 16, 128>}, {pipeline_mode = #tpu.pipeline_mode<synchronous>, transform_indices = @transform_1, window_bounds = array<i64: 128, 128>}, {pipeline_mode = #tpu.pipeline_mode<synchronous>, transform_indices = @transform_2, window_bounds = array<i64: 128, 128>}, {transform_indices = @transform_3, window_bounds = array<i64: 16, 128>}]} {
    %c0 = arith.constant 0 : index
    %c0_0 = arith.constant 0 : index
    %0 = vector.load %arg1[%c0, %c0_0] : memref<16x128xf32, #tpu.memory_space<vmem>>, vector<16x128xf32>
    %c0_1 = arith.constant 0 : index
    %c0_2 = arith.constant 0 : index
    %1 = vector.load %arg2[%c0_1, %c0_2] : memref<128x128xf32, #tpu.memory_space<vmem>>, vector<128x128xf32>
    %cst = arith.constant dense<0.000000e+00> : vector<16x128xf32>
    %2 = tpu.matmul %0, %1, %cst {dimension_numbers = #tpu.dot_dimension_numbers<[1], [0], [0], [1], [0, 0, 1, 1], [], []>} : vector<16x128xf32>, vector<128x128xf32>, vector<16x128xf32> -> vector<16x128xf32>
    %cst_3 = arith.constant 0.000000e+00 : f32
    %3 = vector.broadcast %cst_3 : f32 to vector<16x128xf32>
    %4 = arith.maximumf %2, %3 : vector<16x128xf32>
    %c0_4 = arith.constant 0 : index
    %c0_5 = arith.constant 0 : index
    %5 = vector.load %arg3[%c0_4, %c0_5] : memref<128x128xf32, #tpu.memory_space<vmem>>, vector<128x128xf32>
    %cst_6 = arith.constant dense<0.000000e+00> : vector<16x128xf32>
    %6 = tpu.matmul %4, %5, %cst_6 {dimension_numbers = #tpu.dot_dimension_numbers<[1], [0], [0], [1], [0, 0, 1, 1], [], []>} : vector<16x128xf32>, vector<128x128xf32>, vector<16x128xf32> -> vector<16x128xf32>
    %7 = arith.negf %6 : vector<16x128xf32>
    %8 = math.exp %7 : vector<16x128xf32>
    %cst_7 = arith.constant 1.000000e+00 : f32
    %9 = vector.broadcast %cst_7 : f32 to vector<16x128xf32>
    %10 = arith.addf %9, %8 : vector<16x128xf32>
    %11 = arith.divf %9, %10 : vector<16x128xf32>
    %12 = arith.mulf %0, %11 : vector<16x128xf32>
    %c0_8 = arith.constant 0 : index
    %c0_9 = arith.constant 0 : index
    %13 = vector.load %arg4[%c0_8, %c0_9] : memref<16x128xf32, #tpu.memory_space<vmem>>, vector<16x128xf32>
    tpu.vector_store %arg4[%c0_8, %c0_9], %12 {strides = array<i32>} : memref<16x128xf32, #tpu.memory_space<vmem>>, vector<16x128xf32>,
    return
  }
  func.func @transform_0(%arg0: i32) -> (i32, i32) {
    %c0_i32 = arith.constant 0 : i32
    %c0_i32_0 = arith.constant 0 : i32
    return %arg0, %c0_i32 : i32, i32
  }
  func.func @transform_1(%arg0: i32) -> (i32, i32) {
    %c0_i32 = arith.constant 0 : i32
    %c0_i32_0 = arith.constant 0 : i32
    %c0_i32_1 = arith.constant 0 : i32
    return %c0_i32, %c0_i32_0 : i32, i32
  }
  func.func @transform_2(%arg0: i32) -> (i32, i32) {
    %c0_i32 = arith.constant 0 : i32
    %c0_i32_0 = arith.constant 0 : i32
    %c0_i32_1 = arith.constant 0 : i32
    return %c0_i32, %c0_i32_0 : i32, i32
  }
  func.func @transform_3(%arg0: i32) -> (i32, i32) {
    %c0_i32 = arith.constant 0 : i32
    %c0_i32_0 = arith.constant 0 : i32
    return %arg0, %c0_i32 : i32, i32
  }
}

</mosaic_0001>

<llo_original>
// kernel: tpu_custom_call.1
$region0: #{tpu_custom_call.1}
  #allocation0 [shape = 'u32[]', space=smem, size = 0x4, offset = 0x4, fixed_abs, tag = 'smem constant byte address 0x4 - core index']
  #allocation1 [shape = 'u32[144,128]{1,0:T(1,128)}', space=vmem, size = 0x12000, scoped, tag = 'internal scratch']
  %s0 = inlined_call_operand.hbm [shape: f32[16,128], index: 0, kind: input, shape index: {}]
  %s1 = inlined_call_operand.hbm [shape: f32[128,128], index: 1, kind: input, shape index: {}]
  %s2 = inlined_call_operand.hbm [shape: f32[128,128], index: 2, kind: input, shape index: {}]
  %s3 = inlined_call_operand.hbm [shape: f32[16,128], index: 3, kind: output, shape index: {}]
  %s4 = sld [smem:[#allocation0]]
  $region34: #{tpu_custom_call.1} parent=0
    _
  %s6 = ssub.s32 1, %s4
  %s7 = scalar_select 0, %s6, %s4
  $region1: #{tpu_custom_call.1} parent=0
    #allocation2 [shape = 'u8[8192]{0}', space=vmem, size = 0x2000, scoped, tag = 'input window, operand 0, single buffered']
    #allocation3 [shape = 's32[1]{0}', space=sflag, size = 0x4, scoped, tag = 'scoped memory for tpu_custom_call.1']
    #allocation4 [shape = 's32[1]{0}', space=sflag, size = 0x4, scoped, tag = 'scoped memory for tpu_custom_call.1']
    #allocation5 [shape = 'u8[65536]{0}', space=vmem, size = 0x10000, scoped, tag = 'input window, operand 1, single buffered']
    #allocation6 [shape = 's32[1]{0}', space=sflag, size = 0x4, scoped, tag = 'scoped memory for tpu_custom_call.1']
    #allocation7 [shape = 'u8[65536]{0}', space=vmem, size = 0x10000, scoped, tag = 'input window, operand 2, single buffered']
    #allocation8 [shape = 'u8[8192]{0}', space=vmem, size = 0x2000, scoped, tag = 'output window, operand 0, single buffered']
    %8 = vsyncpa [#allocation3], 0
    %9 = vsyncpa [#allocation6], 0
    %10 = vsyncpa [#allocation4], 0
    // Predicated region
    $region2: #{tpu_custom_call.1} parent=1 // pred_check
      _
    $region3: #{tpu_custom_call.1} parent=1 // pred_check_branch
      %12 = sbr.rel (0) target = $region5
    $region4: #{tpu_custom_call.1} parent=1 // pred_region
      %s14 = ssub.s32 256, 256
      %15 = vsyncadd [#allocation3], %s14
      %s16 = sshll.u32 [#allocation2], 4
      %s17 = int_to_ptr.vmem [resolvable:$true] %s16
      %22 = dma.hbm_to_vmem [thread:$0]  %s0, 256, %s17, [#allocation3], 128, 128, 8
    $region5: #{tpu_custom_call.1} parent=1 // pred_fallthru
      _
    // Predicated region
    $region6: #{tpu_custom_call.1} parent=1 // pred_check
      _
    $region7: #{tpu_custom_call.1} parent=1 // pred_check_branch
      %24 = sbr.rel (0) target = $region9
    $region8: #{tpu_custom_call.1} parent=1 // pred_region
      %s26 = ssub.s32 2048, 2048
      %27 = vsyncadd [#allocation6], %s26
      %s28 = sshll.u32 [#allocation5], 4
      %s29 = int_to_ptr.vmem [resolvable:$true] %s28
      %34 = dma.hbm_to_vmem [thread:$0]  %s1, 2048, %s29, [#allocation6], 128, 128, 8
    $region9: #{tpu_custom_call.1} parent=1 // pred_fallthru
      _
    // Predicated region
    $region10: #{tpu_custom_call.1} parent=1 // pred_check
      _
    $region11: #{tpu_custom_call.1} parent=1 // pred_check_branch
      %36 = sbr.rel (0) target = $region13
    $region12: #{tpu_custom_call.1} parent=1 // pred_region
      %s38 = ssub.s32 2048, 2048
      %39 = vsyncadd [#allocation6], %s38
      %s40 = sshll.u32 [#allocation7], 4
      %s41 = int_to_ptr.vmem [resolvable:$true] %s40
      %46 = dma.hbm_to_vmem [thread:$0]  %s2, 2048, %s41, [#allocation6], 128, 128, 8
    $region13: #{tpu_custom_call.1} parent=1 // pred_fallthru
      _
    // Predicated region
    $region14: #{tpu_custom_call.1} parent=1 // pred_check
      _
    $region15: #{tpu_custom_call.1} parent=1 // pred_check_branch
      %48 = sbr.rel (0) target = $region17
    $region16: #{tpu_custom_call.1} parent=1 // pred_region
      %49 = dma.done [#allocation3], 256
    $region17: #{tpu_custom_call.1} parent=1 // pred_fallthru
      _
    // Predicated region
    $region18: #{tpu_custom_call.1} parent=1 // pred_check
      _
    $region19: #{tpu_custom_call.1} parent=1 // pred_check_branch
      %51 = sbr.rel (0) target = $region21
    $region20: #{tpu_custom_call.1} parent=1 // pred_region
      %52 = dma.done [#allocation6], 2048
    $region21: #{tpu_custom_call.1} parent=1 // pred_fallthru
      _
    // Predicated region
    $region22: #{tpu_custom_call.1} parent=1 // pred_check
      _
    $region23: #{tpu_custom_call.1} parent=1 // pred_check_branch
      %54 = sbr.rel (0) target = $region25
    $region24: #{tpu_custom_call.1} parent=1 // pred_region
      %55 = dma.done [#allocation6], 2048
    $region25: #{tpu_custom_call.1} parent=1 // pred_fallthru
      _
    %v56 = vld [vmem:[#allocation2] sm:$0xff]
    %v57 = vld [vmem:[#allocation2 + $0x8] sm:$0xff]
    %v58 = vld [vmem:[#allocation5] sm:$0xff]
    %v59 = vld [vmem:[#allocation5 + $0x8] sm:$0xff]
    %v60 = vld [vmem:[#allocation5 + $0x10] sm:$0xff]
    %v61 = vld [vmem:[#allocation5 + $0x18] sm:$0xff]
    %v62 = vld [vmem:[#allocation5 + $0x20] sm:$0xff]
    %v63 = vld [vmem:[#allocation5 + $0x28] sm:$0xff]
    %v64 = vld [vmem:[#allocation5 + $0x30] sm:$0xff]
    %v65 = vld [vmem:[#allocation5 + $0x38] sm:$0xff]
    %v66 = vld [vmem:[#allocation5 + $0x40] sm:$0xff]
    %v67 = vld [vmem:[#allocation5 + $0x48] sm:$0xff]
    %v68 = vld [vmem:[#allocation5 + $0x50] sm:$0xff]
    %v69 = vld [vmem:[#allocation5 + $0x58] sm:$0xff]
    %v70 = vld [vmem:[#allocation5 + $0x60] sm:$0xff]
    %v71 = vld [vmem:[#allocation5 + $0x68] sm:$0xff]
    %v72 = vld [vmem:[#allocation5 + $0x70] sm:$0xff]
    %v73 = vld [vmem:[#allocation5 + $0x78] sm:$0xff]
    %74 = vmatprep.subr.mxu0 0.0
    %75 = vmatpush1.msra.mxu0 %v73
    %76 = vmatprep.subr.mxu0 0.0
    %77 = vmatpush1.msra.mxu0 %v72
    %78 = vmatprep.subr.mxu0 0.0
    %79 = vmatpush1.msra.mxu0 %v71
    %80 = vmatprep.subr.mxu0 0.0
    %81 = vmatpush1.msra.mxu0 %v70
    %82 = vmatprep.subr.mxu0 0.0
    %83 = vmatpush1.msra.mxu0 %v69
    %84 = vmatprep.subr.mxu0 0.0
    %85 = vmatpush1.msra.mxu0 %v68
    %86 = vmatprep.subr.mxu0 0.0
    %87 = vmatpush1.msra.mxu0 %v67
    %88 = vmatprep.subr.mxu0 0.0
    %89 = vmatpush1.msra.mxu0 %v66
    %90 = vmatprep.subr.mxu0 0.0
    %91 = vmatpush1.msra.mxu0 %v65
    %92 = vmatprep.subr.mxu0 0.0
    %93 = vmatpush1.msra.mxu0 %v64
    %94 = vmatprep.subr.mxu0 0.0
    %95 = vmatpush1.msra.mxu0 %v63
    %96 = vmatprep.subr.mxu0 0.0
    %97 = vmatpush1.msra.mxu0 %v62
    %98 = vmatprep.subr.mxu0 0.0
    %99 = vmatpush1.msra.mxu0 %v61
    %100 = vmatprep.subr.mxu0 0.0
    %101 = vmatpush1.msra.mxu0 %v60
    %102 = vmatprep.subr.mxu0 0.0
    %103 = vmatpush1.msra.mxu0 %v59
    %104 = vmatprep.subr.mxu0 0.0
    %105 = vmatpush1.msra.mxu0 %v58
    %106 = vmatprep.subr.mxu0 0.0
    %107 = vmatpush2.msra.mxu0 0.0
    %108 = vmatprep.subr.mxu0 0.0
    %109 = vmatpush2.msra.mxu0 0.0
    %110 = vmatprep.subr.mxu0 0.0
    %111 = vmatpush2.msra.mxu0 0.0
    %112 = vmatprep.subr.mxu0 0.0
    %113 = vmatpush2.msra.mxu0 0.0
    %114 = vmatprep.subr.mxu0 0.0
    %115 = vmatpush2.msra.mxu0 0.0
    %116 = vmatprep.subr.mxu0 0.0
    %117 = vmatpush2.msra.mxu0 0.0
    %118 = vmatprep.subr.mxu0 0.0
    %119 = vmatpush2.msra.mxu0 0.0
    %120 = vmatprep.subr.mxu0 0.0
    %121 = vmatpush2.msra.mxu0 0.0
    %122 = vmatprep.subr.mxu0 0.0
    %123 = vmatpush2.msra.mxu0 0.0
    %124 = vmatprep.subr.mxu0 0.0
    %125 = vmatpush2.msra.mxu0 0.0
    %126 = vmatprep.subr.mxu0 0.0
    %127 = vmatpush2.msra.mxu0 0.0
    %128 = vmatprep.subr.mxu0 0.0
    %129 = vmatpush2.msra.mxu0 0.0
    %130 = vmatprep.subr.mxu0 0.0
    %131 = vmatpush2.msra.mxu0 0.0
    %132 = vmatprep.subr.mxu0 0.0
    %133 = vmatpush2.msra.mxu0 0.0
    %134 = vmatprep.subr.mxu0 0.0
    %135 = vmatpush2.msra.mxu0 0.0
    %136 = vmatprep.subr.mxu0 0.0
    %137 = vmatpush2.msra.mxu0 0.0
    %138 = vmatprep.mubr.f32.mxu0 0.0
    %139 = vmatmul.mubr.f32.gmra.mxu0 %v56
    %v140 = vpop.f32.mrf.mxu0
    %v141 = vadd.f32 0.0, %v140
    %v142 = vpop.f32.mrf.mxu0
    %143 = vmatprep.mubr.f32.mxu0 0.0
    %144 = vmatmul.mubr.f32.gmra.mxu0 %v57
    %v145 = vpop.f32.mrf.mxu0
    %v146 = vadd.f32 0.0, %v145
    %v147 = vpop.f32.mrf.mxu0
    %148 = vdwg.mxu0
    %v149 = vmax.f32 %v141, 0.0
    %v150 = vmax.f32 %v146, 0.0
    %v151 = vld [vmem:[#allocation7] sm:$0xff]
    %v152 = vld [vmem:[#allocation7 + $0x8] sm:$0xff]
    %v153 = vld [vmem:[#allocation7 + $0x10] sm:$0xff]
    %v154 = vld [vmem:[#allocation7 + $0x18] sm:$0xff]
    %v155 = vld [vmem:[#allocation7 + $0x20] sm:$0xff]
    %v156 = vld [vmem:[#allocation7 + $0x28] sm:$0xff]
    %v157 = vld [vmem:[#allocation7 + $0x30] sm:$0xff]
    %v158 = vld [vmem:[#allocation7 + $0x38] sm:$0xff]
    %v159 = vld [vmem:[#allocation7 + $0x40] sm:$0xff]
    %v160 = vld [vmem:[#allocation7 + $0x48] sm:$0xff]
    %v161 = vld [vmem:[#allocation7 + $0x50] sm:$0xff]
    %v162 = vld [vmem:[#allocation7 + $0x58] sm:$0xff]
    %v163 = vld [vmem:[#allocation7 + $0x60] sm:$0xff]
    %v164 = vld [vmem:[#allocation7 + $0x68] sm:$0xff]
    %v165 = vld [vmem:[#allocation7 + $0x70] sm:$0xff]
    %v166 = vld [vmem:[#allocation7 + $0x78] sm:$0xff]
    %167 = vmatprep.subr.mxu0 0.0
    %168 = vmatpush1.msra.mxu0 %v166
    %169 = vmatprep.subr.mxu0 0.0
    %170 = vmatpush1.msra.mxu0 %v165
    %171 = vmatprep.subr.mxu0 0.0
    %172 = vmatpush1.msra.mxu0 %v164
    %173 = vmatprep.subr.mxu0 0.0
    %174 = vmatpush1.msra.mxu0 %v163
    %175 = vmatprep.subr.mxu0 0.0
    %176 = vmatpush1.msra.mxu0 %v162
    %177 = vmatprep.subr.mxu0 0.0
    %178 = vmatpush1.msra.mxu0 %v161
    %179 = vmatprep.subr.mxu0 0.0
    %180 = vmatpush1.msra.mxu0 %v160
    %181 = vmatprep.subr.mxu0 0.0
    %182 = vmatpush1.msra.mxu0 %v159
    %183 = vmatprep.subr.mxu0 0.0
    %184 = vmatpush1.msra.mxu0 %v158
    %185 = vmatprep.subr.mxu0 0.0
    %186 = vmatpush1.msra.mxu0 %v157
    %187 = vmatprep.subr.mxu0 0.0
    %188 = vmatpush1.msra.mxu0 %v156
    %189 = vmatprep.subr.mxu0 0.0
    %190 = vmatpush1.msra.mxu0 %v155
    %191 = vmatprep.subr.mxu0 0.0
    %192 = vmatpush1.msra.mxu0 %v154
    %193 = vmatprep.subr.mxu0 0.0
    %194 = vmatpush1.msra.mxu0 %v153
    %195 = vmatprep.subr.mxu0 0.0
    %196 = vmatpush1.msra.mxu0 %v152
    %197 = vmatprep.subr.mxu0 0.0
    %198 = vmatpush1.msra.mxu0 %v151
    %199 = vmatprep.subr.mxu0 0.0
    %200 = vmatpush2.msra.mxu0 0.0
    %201 = vmatprep.subr.mxu0 0.0
    %202 = vmatpush2.msra.mxu0 0.0
    %203 = vmatprep.subr.mxu0 0.0
    %204 = vmatpush2.msra.mxu0 0.0
    %205 = vmatprep.subr.mxu0 0.0
    %206 = vmatpush2.msra.mxu0 0.0
    %207 = vmatprep.subr.mxu0 0.0
    %208 = vmatpush2.msra.mxu0 0.0
    %209 = vmatprep.subr.mxu0 0.0
    %210 = vmatpush2.msra.mxu0 0.0
    %211 = vmatprep.subr.mxu0 0.0
    %212 = vmatpush2.msra.mxu0 0.0
    %213 = vmatprep.subr.mxu0 0.0
    %214 = vmatpush2.msra.mxu0 0.0
    %215 = vmatprep.subr.mxu0 0.0
    %216 = vmatpush2.msra.mxu0 0.0
    %217 = vmatprep.subr.mxu0 0.0
    %218 = vmatpush2.msra.mxu0 0.0
    %219 = vmatprep.subr.mxu0 0.0
    %220 = vmatpush2.msra.mxu0 0.0
    %221 = vmatprep.subr.mxu0 0.0
    %222 = vmatpush2.msra.mxu0 0.0
    %223 = vmatprep.subr.mxu0 0.0
    %224 = vmatpush2.msra.mxu0 0.0
    %225 = vmatprep.subr.mxu0 0.0
    %226 = vmatpush2.msra.mxu0 0.0
    %227 = vmatprep.subr.mxu0 0.0
    %228 = vmatpush2.msra.mxu0 0.0
    %229 = vmatprep.subr.mxu0 0.0
    %230 = vmatpush2.msra.mxu0 0.0
    %231 = vmatprep.mubr.f32.mxu0 0.0
    %232 = vmatmul.mubr.f32.gmra.mxu0 %v149
    %v233 = vpop.f32.mrf.mxu0
    %v234 = vadd.f32 0.0, %v233
    %v235 = vpop.f32.mrf.mxu0
    %236 = vmatprep.mubr.f32.mxu0 0.0
    %237 = vmatmul.mubr.f32.gmra.mxu0 %v150
    %v238 = vpop.f32.mrf.mxu0
    %v239 = vadd.f32 0.0, %v238
    %v240 = vpop.f32.mrf.mxu0
    %241 = vdwg.mxu0
    %v242 = vxor.u32 %v234, 2147483648
    %v243 = vxor.u32 %v239, 2147483648
    %v244 = vmul.f32 %v242, 1.442695
    %v245 = vpow.pop %v244
    %v246 = vmul.f32 %v243, 1.442695
    %v247 = vpow.pop %v246
    %v248 = vadd.f32 %v245, 1.0
    %v249 = vadd.f32 %v247, 1.0
    %v250 = vrcp.pop %v248
    %v251 = vmul.f32 1.0, %v250
    %v252 = vrcp.pop %v249
    %v253 = vmul.f32 1.0, %v252
    %v254 = vmul.f32 %v56, %v251
    %v255 = vmul.f32 %v57, %v253
    %256 = vst [vmem:[#allocation8] sm:$0xff] %v254
    %257 = vst [vmem:[#allocation8 + $0x8] sm:$0xff] %v255
    // Predicated region
    $region26: #{tpu_custom_call.1} parent=1 // pred_check
      _
    $region27: #{tpu_custom_call.1} parent=1 // pred_check_branch
      %259 = sbr.rel (0) target = $region29
    $region28: #{tpu_custom_call.1} parent=1 // pred_region
      %s261 = ssub.s32 256, 256
      %262 = vsyncadd [#allocation4], %s261
      %s263 = sshll.u32 [#allocation8], 4
      %s264 = int_to_ptr.vmem [resolvable:$true] %s263
      %269 = dma.vmem_to_hbm [thread:$0]  %s264, 256, %s3, [#allocation4], 128, 128, 8
    $region29: #{tpu_custom_call.1} parent=1 // pred_fallthru
      _
    // Predicated region
    $region30: #{tpu_custom_call.1} parent=1 // pred_check
      _
    $region31: #{tpu_custom_call.1} parent=1 // pred_check_branch
      %271 = sbr.rel (0) target = $region33
    $region32: #{tpu_custom_call.1} parent=1 // pred_region
      %272 = dma.done [#allocation4], 256
    $region33: #{tpu_custom_call.1} parent=1 // pred_fallthru
      _
    %273 = vsyncpa [#allocation3], 1
    %274 = vsyncpa [#allocation6], 1
    %275 = vsyncpa [#allocation4], 1

</llo_original>
